<compile_context>
chip_gen: v6e
topology: v6e:2x2x1
jax: 0.10.0
libtpu: 0.0.40
codegen_flags: <defaults>
</compile_context>

<pallas_src>
import jax
import jax.numpy as jnp
from jax.experimental import pallas as pl
from jax.experimental.pallas import tpu as pltpu


def _round_up(x: int, m: int) -> int:
    return (x + m - 1) // m * m


def _opl_kernel(lab_row_ref, lab_col_ref, feat_ref, out_ref,
                acc_ref, ssr_ref, ssc_ref):
    # lab_row_ref: (TILE_B, 1) int32   labels of this row block
    # lab_col_ref: (1, B_pad) int32    labels of the full (padded) batch
    # feat_ref   : (B_pad, TILE_D)     streamed feature tile (all batch rows)
    # out_ref    : (1, 8, 128) f32     [0,0,0]=pos_sum, [0,0,1]=neg_sum (row block)
    # acc_ref    : (TILE_B, B_pad) f32 raw gram accumulator
    # ssr_ref    : (TILE_B, 1) f32     sum-of-squares of this row block
    # ssc_ref    : (1, B_pad) f32      sum-of-squares of every column (full batch)
    i = pl.program_id(0)
    k = pl.program_id(1)
    tile_b = acc_ref.shape[0]
    b_pad = acc_ref.shape[1]

    @pl.when(k == 0)
    def _init():
        acc_ref[...] = jnp.zeros_like(acc_ref)
        ssr_ref[...] = jnp.zeros_like(ssr_ref)
        ssc_ref[...] = jnp.zeros_like(ssc_ref)
        out_ref[...] = jnp.zeros_like(out_ref)

    rhs = feat_ref[...]                                   # (B_pad, TILE_D)
    row_off = pl.multiple_of(i * tile_b, tile_b)
    lhs = feat_ref[pl.ds(row_off, tile_b), :]             # (TILE_B, TILE_D), no extra DMA

    # Raw gram block: F[rows] @ F.T as an NT contraction (no materialized
    # transpose), f32 accumulation on the MXU.
    # (On v5e, casting lhs/rhs to bf16 here trades ~1e-3 relative accuracy
    #  for ~3-6x MXU throughput; kept in the input dtype for exactness.)
    acc_ref[...] += jax.lax.dot_general(
        lhs, rhs,
        dimension_numbers=(((1,), (1,)), ((), ())),
        preferred_element_type=jnp.float32,
    )

    # Streamed sum-of-squares (hidden under the feature DMA / matmul).
    lhs_f = lhs.astype(jnp.float32)
    ssr_ref[...] += jnp.sum(lhs_f * lhs_f, axis=1, keepdims=True)   # (TILE_B, 1)
    rhs_f = rhs.astype(jnp.float32)
    sq = rhs_f * rhs_f
    ones_row = jnp.ones((1, sq.shape[1]), jnp.float32)
    ssc_ref[...] += jax.lax.dot_general(                  # (1, B_pad), lane oriented
        ones_row, sq,
        dimension_numbers=(((1,), (1,)), ((), ())),
        preferred_element_type=jnp.float32,
    )

    @pl.when(k == pl.num_programs(1) - 1)
    def _finalize():
        g = acc_ref[...]
        # F.normalize eps: 1/max(||x||,1e-12) == rsqrt(max(||x||^2,1e-24)).
        inv_r = jax.lax.rsqrt(jnp.maximum(ssr_ref[...], 1e-24))     # (TILE_B, 1)
        inv_c = jax.lax.rsqrt(jnp.maximum(ssc_ref[...], 1e-24))     # (1, B_pad)
        dot = g * inv_r * inv_c

        # Padded rows/cols have zero features -> dot == 0 exactly, so they add
        # nothing to either sum; pair counts are handled in the wrapper.
        eq = lab_row_ref[...] == lab_col_ref[...]                   # (TILE_B, B_pad)
        row_g = jax.lax.broadcasted_iota(jnp.int32, (tile_b, b_pad), 0) + row_off
        col_g = jax.lax.broadcasted_iota(jnp.int32, (tile_b, b_pad), 1)
        not_eye = row_g != col_g

        pos_sum = jnp.sum(jnp.where(eq & not_eye, dot, 0.0))
        neg_sum = jnp.sum(jnp.where(eq, 0.0, jnp.abs(dot)))

        lane = jax.lax.broadcasted_iota(jnp.int32, out_ref.shape, 2)
        out_ref[...] = jnp.where(lane == 0, pos_sum,
                                 jnp.where(lane == 1, neg_sum, 0.0))


def orthogonal_projection_loss(features, labels):
    """features: (B, D) float32/bfloat16; labels: (B,) int.

    Returns (loss, pos_pairs_mean, neg_pairs_mean) as f32 scalars, matching the
    PyTorch OrthogonalProjectionLoss forward.
    """
    B, D = features.shape
    itemsize = jnp.dtype(features.dtype).itemsize

    B_pad = _round_up(max(B, 1), 128)
    d_min = _round_up(max(D, 1), 128)

    # --- generation-aware VMEM budget ---------------------------------------
    try:
        vmem_cap = int(pltpu.get_tpu_info().vmem_capacity_bytes)
        num_tc = 2 if vmem_cap <= 64 * 1024 * 1024 else 1   # v7x: 64 MiB/TC, 2 TCs
    except Exception:
        vmem_cap = 64 * 1024 * 1024
        num_tc = 1
    budget = int(0.75 * vmem_cap)

    def footprint(tb, td):
        acc = tb * B_pad * 4
        epilogue_tmps = 4 * acc                          # g / dot / masks / selects
        feat_buf = 2 * B_pad * td * itemsize             # double-buffered input block
        sq_tmps = 2 * B_pad * td * 4 + 2 * tb * td * 4   # f32 squares in the loop
        ss = (tb + B_pad) * 4
        labels_buf = 2 * (2 * tb + B_pad) * 4
        out_buf = 2 * 8 * 128 * 4
        return (acc + epilogue_tmps + feat_buf + sq_tmps + ss + labels_buf
                + out_buf + (2 << 20))

    # Row-tile candidates: multiples of 128 that divide B_pad (largest first).
    m = B_pad // 128
    tile_b_cands = sorted({128 * d for d in range(1, m + 1) if m % d == 0},
                          reverse=True)
    if num_tc > 1 and B_pad >= 128 * num_tc:
        # Give megacore a parallel axis with >= 1 row block per TensorCore.
        pref = [t for t in tile_b_cands if (B_pad // t) >= num_tc]
        if pref:
            tile_b_cands = pref
    # Feature-tile candidates: keep the streamed block large.
    tile_d_cands = sorted(
        {min(d_min, c) for c in (8192, 4096, 2048, 1024, 512, 256, 128)},
        reverse=True)

    tile_b, tile_d = 128, 128
    done = False
    for tb in tile_b_cands:                # maximize tile_b (min re-streaming) ...
        for td in tile_d_cands:            # ... then the per-step feature block
            if footprint(tb, td) <= budget:
                tile_b, tile_d = tb, td
                done = True
                break
        if done:
            break
    # TODO(synk): if even (128, 128) tiles overflow the budget (B_pad beyond
    # ~100k rows), a column-tiling axis over the gram would also be needed.

    D_pad = _round_up(D, tile_d)
    n_k = D_pad // tile_d
    n_b = B_pad // tile_b

    vmem_limit = int(min(max(footprint(tile_b, tile_d), 32 * 1024 * 1024),
                         int(0.9 * vmem_cap)))

    # --- pad operands ---------------------------------------------------------
    feats = features
    if (B_pad, D_pad) != (B, D):
        feats = jnp.pad(feats, ((0, B_pad - B), (0, D_pad - D)))
    labs_real = labels.astype(jnp.int32).reshape(B)
    labs = labs_real
    if B_pad != B:
        labs = jnp.pad(labs_real, (0, B_pad - B), constant_values=-1)
    lab_row = labs.reshape(B_pad, 1)
    lab_col = labs.reshape(1, B_pad)

    cost = pl.CostEstimate(
        flops=2 * B_pad * B_pad * D_pad + 2 * n_b * B_pad * D_pad,
        transcendentals=n_b * (tile_b + B_pad),
        bytes_accessed=n_b * B_pad * D_pad * itemsize + 2 * B_pad * 4
        + n_b * 8 * 128 * 4,
    )

    grid_spec = pltpu.PrefetchScalarGridSpec(
        num_scalar_prefetch=0,
        grid=(n_b, n_k),
        in_specs=[
            pl.BlockSpec((tile_b, 1), lambda i, k: (i, 0)),       # labels, rows
            pl.BlockSpec((1, B_pad), lambda i, k: (0, 0)),        # labels, lanes
            pl.BlockSpec((B_pad, tile_d), lambda i, k: (0, k)),   # streamed features
        ],
        out_specs=pl.BlockSpec((1, 8, 128), lambda i, k: (i, 0, 0)),
        scratch_shapes=[
            pltpu.VMEM((tile_b, B_pad), jnp.float32),   # raw gram accumulator
            pltpu.VMEM((tile_b, 1), jnp.float32),       # row sum-of-squares
            pltpu.VMEM((1, B_pad), jnp.float32),        # column sum-of-squares
        ],
    )

    partials = pl.pallas_call(
        _opl_kernel,
        out_shape=jax.ShapeDtypeStruct((n_b, 8, 128), jnp.float32),
        grid_spec=grid_spec,
        compiler_params=pltpu.CompilerParams(
            dimension_semantics=("parallel", "arbitrary"),
            vmem_limit_bytes=vmem_limit,
        ),
        cost_estimate=cost,
    )(lab_row, lab_col, feats)

    # --- tiny scalar combine in the wrapper ----------------------------------
    pos_total = jnp.sum(partials[:, 0, 0])
    neg_total = jnp.sum(partials[:, 0, 1])

    eq_real = (labs_real[:, None] == labs_real[None, :]).astype(jnp.float32)
    same = jnp.sum(eq_real)                        # includes the B diagonal entries
    b_f = jnp.float32(B)
    pos_mean = pos_total / ((same - b_f) + 1e-6)           # mask_pos.sum() == same - B
    neg_mean = neg_total / ((b_f * b_f - same) + 1e-6)     # mask_neg.sum() == B*B - same
    loss = 1.0 - pos_mean + 0.7 * neg_mean
    return loss, pos_mean, neg_mean


if __name__ == "__main__":
    key = jax.random.PRNGKey(0)
    kf, kl = jax.random.split(key)

    B, D = 8, 32
    features = jax.random.normal(kf, (B, D), dtype=jnp.float32)
    labels = jax.random.randint(kl, (B,), 0, 4, dtype=jnp.int32)

    loss, pos_mean, neg_mean = orthogonal_projection_loss(features, labels)
    jax.block_until_ready((loss, pos_mean, neg_mean))

    # Pure-JAX reference (same math as the PyTorch module).
    fn = features / jnp.maximum(
        jnp.sqrt(jnp.sum(features * features, axis=1, keepdims=True)), 1e-12)
    dot = jnp.dot(fn, fn.T, precision=jax.lax.Precision.HIGHEST)
    mask = labels[:, None] == labels[None, :]
    eye = jnp.eye(B, dtype=bool)
    mask_pos = jnp.where(eye, 0.0, mask.astype(jnp.float32))
    mask_neg = (~mask).astype(jnp.float32)
    ref_pos = jnp.sum(mask_pos * dot) / (jnp.sum(mask_pos) + 1e-6)
    ref_neg = jnp.sum(jnp.abs(mask_neg * dot)) / (jnp.sum(mask_neg) + 1e-6)
    ref_loss = 1.0 - ref_pos + 0.7 * ref_neg

    assert jnp.allclose(loss, ref_loss, atol=1e-3), (loss, ref_loss)
    assert jnp.allclose(pos_mean, ref_pos, atol=1e-3), (pos_mean, ref_pos)
    assert jnp.allclose(neg_mean, ref_neg, atol=1e-3), (neg_mean, ref_neg)

    print("KERNEL_OK")
</pallas_src>

<mosaic_0001>
module attributes {stable_mosaic.version = 11 : i64} {
  func.func @_opl_kernel(%arg0: i32, %arg1: i32, %arg2: memref<128x1xi32, #tpu.memory_space<vmem>>, %arg3: memref<1x128xi32, #tpu.memory_space<vmem>>, %arg4: memref<128x128xf32, #tpu.memory_space<vmem>>, %arg5: memref<1x8x128xf32, #tpu.memory_space<vmem>>, %arg6: memref<128x128xf32, #tpu.memory_space<vmem>>, %arg7: memref<128x1xf32, #tpu.memory_space<vmem>>, %arg8: memref<1x128xf32, #tpu.memory_space<vmem>>) attributes {dimension_semantics = [#tpu.dimension_semantics<parallel>, #tpu.dimension_semantics<arbitrary>], iteration_bounds = array<i64: 1, 1>, scalar_prefetch = 0 : i64, scratch_operands = 3 : i64, tpu.core_type = #tpu.core_type<tc>, window_params = [{transform_indices = @transform_0, window_bounds = array<i64: 128, 1>}, {pipeline_mode = #tpu.pipeline_mode<synchronous>, transform_indices = @transform_1, window_bounds = array<i64: 1, 128>}, {transform_indices = @transform_2, window_bounds = array<i64: 128, 128>}, {transform_indices = @transform_3, window_bounds = array<i64: 1, 8, 128>}]} {
    %c0_i32 = arith.constant 0 : i32
    %0 = arith.cmpi eq, %arg1, %c0_i32 : i32
    %1 = arith.extui %0 : i1 to i32
    %c0_i32_0 = arith.constant 0 : i32
    %2 = arith.cmpi ne, %1, %c0_i32_0 : i32
    scf.if %2 {
      %cst_20 = arith.constant 0.000000e+00 : f32
      %27 = vector.broadcast %cst_20 : f32 to vector<128x128xf32>
      %c0_21 = arith.constant 0 : index
      %c0_22 = arith.constant 0 : index
      %28 = vector.load %arg6[%c0_21, %c0_22] : memref<128x128xf32, #tpu.memory_space<vmem>>, vector<128x128xf32>
      tpu.vector_store %arg6[%c0_21, %c0_22], %27 {strides = array<i32>} : memref<128x128xf32, #tpu.memory_space<vmem>>, vector<128x128xf32>,
      %cst_23 = arith.constant 0.000000e+00 : f32
      %29 = vector.broadcast %cst_23 : f32 to vector<128x1xf32>
      %c0_24 = arith.constant 0 : index
      %c0_25 = arith.constant 0 : index
      %30 = vector.load %arg7[%c0_24, %c0_25] : memref<128x1xf32, #tpu.memory_space<vmem>>, vector<128x1xf32>
      tpu.vector_store %arg7[%c0_24, %c0_25], %29 {strides = array<i32>} : memref<128x1xf32, #tpu.memory_space<vmem>>, vector<128x1xf32>,
      %cst_26 = arith.constant 0.000000e+00 : f32
      %31 = vector.broadcast %cst_26 : f32 to vector<1x128xf32>
      %c0_27 = arith.constant 0 : index
      %c0_28 = arith.constant 0 : index
      %32 = vector.load %arg8[%c0_27, %c0_28] : memref<1x128xf32, #tpu.memory_space<vmem>>, vector<1x128xf32>
      tpu.vector_store %arg8[%c0_27, %c0_28], %31 {strides = array<i32>} : memref<1x128xf32, #tpu.memory_space<vmem>>, vector<1x128xf32>,
      %cst_29 = arith.constant 0.000000e+00 : f32
      %33 = vector.broadcast %cst_29 : f32 to vector<1x8x128xf32>
      %c0_30 = arith.constant 0 : index
      %c0_31 = arith.constant 0 : index
      %c0_32 = arith.constant 0 : index
      %34 = vector.load %arg5[%c0_30, %c0_31, %c0_32] : memref<1x8x128xf32, #tpu.memory_space<vmem>>, vector<1x8x128xf32>
      tpu.vector_store %arg5[%c0_30, %c0_31, %c0_32], %33 {strides = array<i32>} : memref<1x8x128xf32, #tpu.memory_space<vmem>>, vector<1x8x128xf32>,
    } else {
    }
    %c0 = arith.constant 0 : index
    %c0_1 = arith.constant 0 : index
    %3 = vector.load %arg4[%c0, %c0_1] : memref<128x128xf32, #tpu.memory_space<vmem>>, vector<128x128xf32>
    %c128_i32 = arith.constant 128 : i32
    %4 = arith.muli %arg0, %c128_i32 : i32
    %5 = tpu.assume_multiple %4, 128 : i32
    %6 = arith.index_cast %5 : i32 to index
    %c0_2 = arith.constant 0 : index
    %7 = vector.load %arg4[%6, %c0_2] : memref<128x128xf32, #tpu.memory_space<vmem>>, vector<128x128xf32>
    %c0_3 = arith.constant 0 : index
    %c0_4 = arith.constant 0 : index
    %8 = vector.load %arg6[%c0_3, %c0_4] : memref<128x128xf32, #tpu.memory_space<vmem>>, vector<128x128xf32>
    %cst = arith.constant dense<0.000000e+00> : vector<128x128xf32>
    %9 = tpu.matmul %7, %3, %cst {dimension_numbers = #tpu.dot_dimension_numbers<[1], [1], [0], [0], [0, 0, 1, 0], [], []>} : vector<128x128xf32>, vector<128x128xf32>, vector<128x128xf32> -> vector<128x128xf32>
    %10 = arith.addf %8, %9 : vector<128x128xf32>
    %c0_5 = arith.constant 0 : index
    %c0_6 = arith.constant 0 : index
    %11 = vector.load %arg6[%c0_5, %c0_6] : memref<128x128xf32, #tpu.memory_space<vmem>>, vector<128x128xf32>
    tpu.vector_store %arg6[%c0_5, %c0_6], %10 {strides = array<i32>} : memref<128x128xf32, #tpu.memory_space<vmem>>, vector<128x128xf32>,
    %c0_7 = arith.constant 0 : index
    %c0_8 = arith.constant 0 : index
    %12 = vector.load %arg7[%c0_7, %c0_8] : memref<128x1xf32, #tpu.memory_space<vmem>>, vector<128x1xf32>
    %13 = arith.mulf %7, %7 : vector<128x128xf32>
    %cst_9 = arith.constant dense<0.000000e+00> : vector<128xf32>
    %14 = vector.multi_reduction <add>, %13, %cst_9 [1] : vector<128x128xf32> to vector<128xf32>
    %15 = vector.shape_cast %14 : vector<128xf32> to vector<128x1xf32>
    %16 = arith.addf %12, %15 : vector<128x1xf32>
    %c0_10 = arith.constant 0 : index
    %c0_11 = arith.constant 0 : index
    %17 = vector.load %arg7[%c0_10, %c0_11] : memref<128x1xf32, #tpu.memory_space<vmem>>, vector<128x1xf32>
    tpu.vector_store %arg7[%c0_10, %c0_11], %16 {strides = array<i32>} : memref<128x1xf32, #tpu.memory_space<vmem>>, vector<128x1xf32>,
    %18 = arith.mulf %3, %3 : vector<128x128xf32>
    %cst_12 = arith.constant 1.000000e+00 : f32
    %19 = vector.broadcast %cst_12 : f32 to vector<1x128xf32>
    %c0_13 = arith.constant 0 : index
    %c0_14 = arith.constant 0 : index
    %20 = vector.load %arg8[%c0_13, %c0_14] : memref<1x128xf32, #tpu.memory_space<vmem>>, vector<1x128xf32>
    %cst_15 = arith.constant dense<0.000000e+00> : vector<1x128xf32>
    %21 = tpu.matmul %19, %18, %cst_15 {dimension_numbers = #tpu.dot_dimension_numbers<[1], [1], [0], [0], [0, 0, 1, 0], [], []>} : vector<1x128xf32>, vector<128x128xf32>, vector<1x128xf32> -> vector<1x128xf32>
    %22 = arith.addf %20, %21 : vector<1x128xf32>
    %c0_16 = arith.constant 0 : index
    %c0_17 = arith.constant 0 : index
    %23 = vector.load %arg8[%c0_16, %c0_17] : memref<1x128xf32, #tpu.memory_space<vmem>>, vector<1x128xf32>
    tpu.vector_store %arg8[%c0_16, %c0_17], %22 {strides = array<i32>} : memref<1x128xf32, #tpu.memory_space<vmem>>, vector<1x128xf32>,
    %c0_i32_18 = arith.constant 0 : i32
    %24 = arith.cmpi eq, %arg1, %c0_i32_18 : i32
    %25 = arith.extui %24 : i1 to i32
    %c0_i32_19 = arith.constant 0 : i32
    %26 = arith.cmpi ne, %25, %c0_i32_19 : i32
    scf.if %26 {
      %c0_20 = arith.constant 0 : index
      %c0_21 = arith.constant 0 : index
      %27 = vector.load %arg6[%c0_20, %c0_21] : memref<128x128xf32, #tpu.memory_space<vmem>>, vector<128x128xf32>
      %c0_22 = arith.constant 0 : index
      %c0_23 = arith.constant 0 : index
      %28 = vector.load %arg7[%c0_22, %c0_23] : memref<128x1xf32, #tpu.memory_space<vmem>>, vector<128x1xf32>
      %cst_24 = arith.constant 1.000000e-24 : f32
      %29 = vector.broadcast %cst_24 : f32 to vector<128x1xf32>
      %30 = arith.maximumf %28, %29 : vector<128x1xf32>
      %31 = math.rsqrt %30 : vector<128x1xf32>
      %c0_25 = arith.constant 0 : index
      %c0_26 = arith.constant 0 : index
      %32 = vector.load %arg8[%c0_25, %c0_26] : memref<1x128xf32, #tpu.memory_space<vmem>>, vector<1x128xf32>
      %cst_27 = arith.constant 1.000000e-24 : f32
      %33 = vector.broadcast %cst_27 : f32 to vector<1x128xf32>
      %34 = arith.maximumf %32, %33 : vector<1x128xf32>
      %35 = math.rsqrt %34 : vector<1x128xf32>
      %36 = vector.broadcast %31 : vector<128x1xf32> to vector<128x128xf32>
      %37 = arith.mulf %27, %36 : vector<128x128xf32>
      %38 = vector.broadcast %35 : vector<1x128xf32> to vector<128x128xf32>
      %39 = arith.mulf %37, %38 : vector<128x128xf32>
      %c0_28 = arith.constant 0 : index
      %c0_29 = arith.constant 0 : index
      %40 = vector.load %arg2[%c0_28, %c0_29] : memref<128x1xi32, #tpu.memory_space<vmem>>, vector<128x1xi32>
      %c0_30 = arith.constant 0 : index
      %c0_31 = arith.constant 0 : index
      %41 = vector.load %arg3[%c0_30, %c0_31] : memref<1x128xi32, #tpu.memory_space<vmem>>, vector<1x128xi32>
      %42 = vector.broadcast %40 : vector<128x1xi32> to vector<128x128xi32>
      %43 = vector.broadcast %41 : vector<1x128xi32> to vector<128x128xi32>
      %44 = arith.cmpi eq, %42, %43 : vector<128x128xi32>
      %45 = tpu.iota {dimensions = array<i32: 0>} : vector<128x128xi32>
      %46 = vector.broadcast %5 : i32 to vector<128x128xi32>
      %47 = arith.addi %45, %46 : vector<128x128xi32>
      %48 = tpu.iota {dimensions = array<i32: 1>} : vector<128x128xi32>
      %49 = arith.cmpi ne, %47, %48 : vector<128x128xi32>
      %50 = arith.andi %44, %49 : vector<128x128xi1>
      %cst_32 = arith.constant 0.000000e+00 : f32
      %51 = vector.broadcast %cst_32 : f32 to vector<128x128xf32>
      %52 = arith.select %50, %39, %51 : vector<128x128xi1>, vector<128x128xf32>
      %53 = vector.shape_cast %52 : vector<128x128xf32> to vector<1x128x128xf32>
      %cst_33 = arith.constant dense<0.000000e+00> : vector<1xf32>
      %54 = vector.multi_reduction <add>, %53, %cst_33 [1, 2] : vector<1x128x128xf32> to vector<1xf32>
      %55 = vector.shape_cast %54 : vector<1xf32> to vector<1x1x1xf32>
      %56 = vector.extract %55[0, 0, 0] : f32 from vector<1x1x1xf32>
      %57 = math.absf %39 : vector<128x128xf32>
      %cst_34 = arith.constant 0.000000e+00 : f32
      %58 = vector.broadcast %cst_34 : f32 to vector<128x128xf32>
      %59 = arith.select %44, %58, %57 : vector<128x128xi1>, vector<128x128xf32>
      %60 = vector.shape_cast %59 : vector<128x128xf32> to vector<1x128x128xf32>
      %cst_35 = arith.constant dense<0.000000e+00> : vector<1xf32>
      %61 = vector.multi_reduction <add>, %60, %cst_35 [1, 2] : vector<1x128x128xf32> to vector<1xf32>
      %62 = vector.shape_cast %61 : vector<1xf32> to vector<1x1x1xf32>
      %63 = vector.extract %62[0, 0, 0] : f32 from vector<1x1x1xf32>
      %64 = tpu.iota {dimensions = array<i32: 2>} : vector<1x8x128xi32>
      %c0_i32_36 = arith.constant 0 : i32
      %65 = vector.broadcast %c0_i32_36 : i32 to vector<1x8x128xi32>
      %66 = arith.cmpi eq, %64, %65 : vector<1x8x128xi32>
      %c1_i32 = arith.constant 1 : i32
      %67 = vector.broadcast %c1_i32 : i32 to vector<1x8x128xi32>
      %68 = arith.cmpi eq, %64, %67 : vector<1x8x128xi32>
      %cst_37 = arith.constant 0.000000e+00 : f32
      %69 = vector.broadcast %63 : f32 to vector<1x8x128xf32>
      %70 = vector.broadcast %cst_37 : f32 to vector<1x8x128xf32>
      %71 = arith.select %68, %69, %70 : vector<1x8x128xi1>, vector<1x8x128xf32>
      %72 = vector.broadcast %56 : f32 to vector<1x8x128xf32>
      %73 = arith.select %66, %72, %71 : vector<1x8x128xi1>, vector<1x8x128xf32>
      %c0_38 = arith.constant 0 : index
      %c0_39 = arith.constant 0 : index
      %c0_40 = arith.constant 0 : index
      %74 = vector.load %arg5[%c0_38, %c0_39, %c0_40] : memref<1x8x128xf32, #tpu.memory_space<vmem>>, vector<1x8x128xf32>
      tpu.vector_store %arg5[%c0_38, %c0_39, %c0_40], %73 {strides = array<i32>} : memref<1x8x128xf32, #tpu.memory_space<vmem>>, vector<1x8x128xf32>,
    } else {
    }
    return
  }
  func.func @transform_0(%arg0: i32, %arg1: i32) -> (i32, i32) {
    %c0_i32 = arith.constant 0 : i32
    %c0_i32_0 = arith.constant 0 : i32
    return %arg0, %c0_i32 : i32, i32
  }
  func.func @transform_1(%arg0: i32, %arg1: i32) -> (i32, i32) {
    %c0_i32 = arith.constant 0 : i32
    %c0_i32_0 = arith.constant 0 : i32
    %c0_i32_1 = arith.constant 0 : i32
    return %c0_i32, %c0_i32_0 : i32, i32
  }
  func.func @transform_2(%arg0: i32, %arg1: i32) -> (i32, i32) {
    %c0_i32 = arith.constant 0 : i32
    %c0_i32_0 = arith.constant 0 : i32
    return %c0_i32, %arg1 : i32, i32
  }
  func.func @transform_3(%arg0: i32, %arg1: i32) -> (i32, i32, i32) {
    %c0_i32 = arith.constant 0 : i32
    %c0_i32_0 = arith.constant 0 : i32
    %c0_i32_1 = arith.constant 0 : i32
    return %arg0, %c0_i32, %c0_i32_0 : i32, i32, i32
  }
}

</mosaic_0001>

<llo_original>
// kernel: tpu_custom_call.1
$region0: #{tpu_custom_call.1}
  #allocation0 [shape = 'u32[]', space=smem, size = 0x4, offset = 0x4, fixed_abs, tag = 'smem constant byte address 0x4 - core index']
  #allocation1 [shape = 'u32[144,128]{1,0:T(1,128)}', space=vmem, size = 0x12000, scoped, tag = 'internal scratch']
  #allocation2 [shape = 'f32[128,128]{1,0:T(8,128)}', space=vmem, size = 0x10000, scoped, tag = 'scratch operand']
  #allocation3 [shape = 'f32[128,1]{1,0:T(8,128)}', space=vmem, size = 0x10000, scoped, tag = 'scratch operand']
  #allocation4 [shape = 'f32[1,128]{1,0:T(1,128)}', space=vmem, size = 0x200, scoped, tag = 'scratch operand']
  %s0 = inlined_call_operand.vmem [shape: s32[128,1], index: 0, kind: input, shape index: {}]
  %s1 = inlined_call_operand.vmem [shape: s32[1,128], index: 1, kind: input, shape index: {}]
  %s2 = inlined_call_operand.vmem [shape: f32[128,128], index: 2, kind: input, shape index: {}]
  %s3 = inlined_call_operand.hbm [shape: f32[1,8,128], index: 3, kind: output, shape index: {}]
  %s4 = sld [smem:[#allocation0]]
  $region30: #{tpu_custom_call.1} parent=0
    _
  %s6 = ssub.s32 1, %s4
  %s7 = scalar_select 0, %s6, %s4
  $region1: #{tpu_custom_call.1} parent=0
    #allocation5 [shape = 'u8[4096]{0}', space=vmem, size = 0x1000, scoped, tag = 'output window, operand 0, single buffered']
    #allocation6 [shape = 's32[1]{0}', space=sflag, size = 0x4, scoped, tag = 'scoped memory for tpu_custom_call.1']
    %8 = vsyncpa [#allocation6], 0
    // Predicated region
    $region2: #{tpu_custom_call.1} parent=1 // pred_check
      _
    $region3: #{tpu_custom_call.1} parent=1 // pred_check_branch
      %10 = sbr.rel (0) target = $region5
    $region4: #{tpu_custom_call.1} parent=1 // pred_region
      _
    $region5: #{tpu_custom_call.1} parent=1 // pred_fallthru
      _
    // Predicated region
    $region6: #{tpu_custom_call.1} parent=1 // pred_check
      _
    $region7: #{tpu_custom_call.1} parent=1 // pred_check_branch
      %12 = sbr.rel (0) target = $region9
    $region8: #{tpu_custom_call.1} parent=1 // pred_region
      _
    $region9: #{tpu_custom_call.1} parent=1 // pred_fallthru
      _
    // Predicated region
    $region10: #{tpu_custom_call.1} parent=1 // pred_check
      _
    $region11: #{tpu_custom_call.1} parent=1 // pred_check_branch
      %14 = sbr.rel (0) target = $region13
    $region12: #{tpu_custom_call.1} parent=1 // pred_region
      _
    $region13: #{tpu_custom_call.1} parent=1 // pred_fallthru
      _
    %p15 = scmp.eq.s32.totalorder 0, 0
    // Predicated region
    $region14: #{tpu_custom_call.1} parent=1 // pred_check
      %p16 = pneg %p15
    $region15: #{tpu_custom_call.1} parent=1 // pred_check_branch
      %18 = sbr.rel (%p16) target = $region17
    $region16: #{tpu_custom_call.1} parent=1 // pred_region
      %19 = vst [vmem:[#allocation2] sm:$0xff] 0.0
      %20 = vst [vmem:[#allocation2 + $0x8] sm:$0xff] 0.0
      %21 = vst [vmem:[#allocation2 + $0x10] sm:$0xff] 0.0
      %22 = vst [vmem:[#allocation2 + $0x18] sm:$0xff] 0.0
      %23 = vst [vmem:[#allocation2 + $0x20] sm:$0xff] 0.0
      %24 = vst [vmem:[#allocation2 + $0x28] sm:$0xff] 0.0
      %25 = vst [vmem:[#allocation2 + $0x30] sm:$0xff] 0.0
      %26 = vst [vmem:[#allocation2 + $0x38] sm:$0xff] 0.0
      %27 = vst [vmem:[#allocation2 + $0x40] sm:$0xff] 0.0
      %28 = vst [vmem:[#allocation2 + $0x48] sm:$0xff] 0.0
      %29 = vst [vmem:[#allocation2 + $0x50] sm:$0xff] 0.0
      %30 = vst [vmem:[#allocation2 + $0x58] sm:$0xff] 0.0
      %31 = vst [vmem:[#allocation2 + $0x60] sm:$0xff] 0.0
      %32 = vst [vmem:[#allocation2 + $0x68] sm:$0xff] 0.0
      %33 = vst [vmem:[#allocation2 + $0x70] sm:$0xff] 0.0
      %34 = vst [vmem:[#allocation2 + $0x78] sm:$0xff] 0.0
      %vm35 = vcmask 7168
      %36 = vst.msk [vmem:[#allocation3] sm:$0xff] %vm35, 0.0
      %37 = vst.msk [vmem:[#allocation3 + $0x8] sm:$0xff] %vm35, 0.0
      %38 = vst.msk [vmem:[#allocation3 + $0x10] sm:$0xff] %vm35, 0.0
      %39 = vst.msk [vmem:[#allocation3 + $0x18] sm:$0xff] %vm35, 0.0
      %40 = vst.msk [vmem:[#allocation3 + $0x20] sm:$0xff] %vm35, 0.0
      %41 = vst.msk [vmem:[#allocation3 + $0x28] sm:$0xff] %vm35, 0.0
      %42 = vst.msk [vmem:[#allocation3 + $0x30] sm:$0xff] %vm35, 0.0
      %43 = vst.msk [vmem:[#allocation3 + $0x38] sm:$0xff] %vm35, 0.0
      %44 = vst.msk [vmem:[#allocation3 + $0x40] sm:$0xff] %vm35, 0.0
      %45 = vst.msk [vmem:[#allocation3 + $0x48] sm:$0xff] %vm35, 0.0
      %46 = vst.msk [vmem:[#allocation3 + $0x50] sm:$0xff] %vm35, 0.0
      %47 = vst.msk [vmem:[#allocation3 + $0x58] sm:$0xff] %vm35, 0.0
      %48 = vst.msk [vmem:[#allocation3 + $0x60] sm:$0xff] %vm35, 0.0
      %49 = vst.msk [vmem:[#allocation3 + $0x68] sm:$0xff] %vm35, 0.0
      %50 = vst.msk [vmem:[#allocation3 + $0x70] sm:$0xff] %vm35, 0.0
      %51 = vst.msk [vmem:[#allocation3 + $0x78] sm:$0xff] %vm35, 0.0
      %52 = vst [vmem:[#allocation4] sm:$0x1] 0.0
      %53 = vst [vmem:[#allocation5] sm:$0xff] 0.0
    $region17: #{tpu_custom_call.1} parent=1 // pred_fallthru
      _
    %v54 = vld [vmem:[%s2] sm:$0xff]
    %v55 = vld [vmem:[%s2 + $0x8] sm:$0xff]
    %v56 = vld [vmem:[%s2 + $0x10] sm:$0xff]
    %v57 = vld [vmem:[%s2 + $0x18] sm:$0xff]
    %v58 = vld [vmem:[%s2 + $0x20] sm:$0xff]
    %v59 = vld [vmem:[%s2 + $0x28] sm:$0xff]
    %v60 = vld [vmem:[%s2 + $0x30] sm:$0xff]
    %v61 = vld [vmem:[%s2 + $0x38] sm:$0xff]
    %v62 = vld [vmem:[%s2 + $0x40] sm:$0xff]
    %v63 = vld [vmem:[%s2 + $0x48] sm:$0xff]
    %v64 = vld [vmem:[%s2 + $0x50] sm:$0xff]
    %v65 = vld [vmem:[%s2 + $0x58] sm:$0xff]
    %v66 = vld [vmem:[%s2 + $0x60] sm:$0xff]
    %v67 = vld [vmem:[%s2 + $0x68] sm:$0xff]
    %v68 = vld [vmem:[%s2 + $0x70] sm:$0xff]
    %v69 = vld [vmem:[%s2 + $0x78] sm:$0xff]
    %s70 = smul.u32 0, 128
    %s71 = scalar_lea.vmem %s2, %s70
    %v72 = vld [vmem:[%s71] sm:$0xff]
    %v73 = vld [vmem:[%s71 + $0x8] sm:$0xff]
    %v74 = vld [vmem:[%s71 + $0x10] sm:$0xff]
    %v75 = vld [vmem:[%s71 + $0x18] sm:$0xff]
    %v76 = vld [vmem:[%s71 + $0x20] sm:$0xff]
    %v77 = vld [vmem:[%s71 + $0x28] sm:$0xff]
    %v78 = vld [vmem:[%s71 + $0x30] sm:$0xff]
    %v79 = vld [vmem:[%s71 + $0x38] sm:$0xff]
    %v80 = vld [vmem:[%s71 + $0x40] sm:$0xff]
    %v81 = vld [vmem:[%s71 + $0x48] sm:$0xff]
    %v82 = vld [vmem:[%s71 + $0x50] sm:$0xff]
    %v83 = vld [vmem:[%s71 + $0x58] sm:$0xff]
    %v84 = vld [vmem:[%s71 + $0x60] sm:$0xff]
    %v85 = vld [vmem:[%s71 + $0x68] sm:$0xff]
    %v86 = vld [vmem:[%s71 + $0x70] sm:$0xff]
    %v87 = vld [vmem:[%s71 + $0x78] sm:$0xff]
    %v88 = vld [vmem:[#allocation2] sm:$0xff]
    %v89 = vld [vmem:[#allocation2 + $0x8] sm:$0xff]
    %v90 = vld [vmem:[#allocation2 + $0x10] sm:$0xff]
    %v91 = vld [vmem:[#allocation2 + $0x18] sm:$0xff]
    %v92 = vld [vmem:[#allocation2 + $0x20] sm:$0xff]
    %v93 = vld [vmem:[#allocation2 + $0x28] sm:$0xff]
    %v94 = vld [vmem:[#allocation2 + $0x30] sm:$0xff]
    %v95 = vld [vmem:[#allocation2 + $0x38] sm:$0xff]
    %v96 = vld [vmem:[#allocation2 + $0x40] sm:$0xff]
    %v97 = vld [vmem:[#allocation2 + $0x48] sm:$0xff]
    %v98 = vld [vmem:[#allocation2 + $0x50] sm:$0xff]
    %v99 = vld [vmem:[#allocation2 + $0x58] sm:$0xff]
    %v100 = vld [vmem:[#allocation2 + $0x60] sm:$0xff]
    %v101 = vld [vmem:[#allocation2 + $0x68] sm:$0xff]
    %v102 = vld [vmem:[#allocation2 + $0x70] sm:$0xff]
    %v103 = vld [vmem:[#allocation2 + $0x78] sm:$0xff]
    %104 = vmatprep.subr.mxu0 0.0
    %105 = vmatpush1.xpose.msra.mxu0 %v69
    %106 = vmatprep.subr.mxu0 0.0
    %107 = vmatpush1.xpose.msra.mxu0 %v68
    %108 = vmatprep.subr.mxu0 0.0
    %109 = vmatpush1.xpose.msra.mxu0 %v67
    %110 = vmatprep.subr.mxu0 0.0
    %111 = vmatpush1.xpose.msra.mxu0 %v66
    %112 = vmatprep.subr.mxu0 0.0
    %113 = vmatpush1.xpose.msra.mxu0 %v65
    %114 = vmatprep.subr.mxu0 0.0
    %115 = vmatpush1.xpose.msra.mxu0 %v64
    %116 = vmatprep.subr.mxu0 0.0
    %117 = vmatpush1.xpose.msra.mxu0 %v63
    %118 = vmatprep.subr.mxu0 0.0
    %119 = vmatpush1.xpose.msra.mxu0 %v62
    %120 = vmatprep.subr.mxu0 0.0
    %121 = vmatpush1.xpose.msra.mxu0 %v61
    %122 = vmatprep.subr.mxu0 0.0
    %123 = vmatpush1.xpose.msra.mxu0 %v60
    %124 = vmatprep.subr.mxu0 0.0
    %125 = vmatpush1.xpose.msra.mxu0 %v59
    %126 = vmatprep.subr.mxu0 0.0
    %127 = vmatpush1.xpose.msra.mxu0 %v58
    %128 = vmatprep.subr.mxu0 0.0
    %129 = vmatpush1.xpose.msra.mxu0 %v57
    %130 = vmatprep.subr.mxu0 0.0
    %131 = vmatpush1.xpose.msra.mxu0 %v56
    %132 = vmatprep.subr.mxu0 0.0
    %133 = vmatpush1.xpose.msra.mxu0 %v55
    %134 = vmatprep.subr.mxu0 0.0
    %135 = vmatpush1.xpose.msra.mxu0 %v54
    %136 = vmatprep.subr.mxu0 0.0
    %137 = vmatpush2.xpose.msra.mxu0 0.0
    %138 = vmatprep.subr.mxu0 0.0
    %139 = vmatpush2.xpose.msra.mxu0 0.0
    %140 = vmatprep.subr.mxu0 0.0
    %141 = vmatpush2.xpose.msra.mxu0 0.0
    %142 = vmatprep.subr.mxu0 0.0
    %143 = vmatpush2.xpose.msra.mxu0 0.0
    %144 = vmatprep.subr.mxu0 0.0
    %145 = vmatpush2.xpose.msra.mxu0 0.0
    %146 = vmatprep.subr.mxu0 0.0
    %147 = vmatpush2.xpose.msra.mxu0 0.0
    %148 = vmatprep.subr.mxu0 0.0
    %149 = vmatpush2.xpose.msra.mxu0 0.0
    %150 = vmatprep.subr.mxu0 0.0
    %151 = vmatpush2.xpose.msra.mxu0 0.0
    %152 = vmatprep.subr.mxu0 0.0
    %153 = vmatpush2.xpose.msra.mxu0 0.0
    %154 = vmatprep.subr.mxu0 0.0
    %155 = vmatpush2.xpose.msra.mxu0 0.0
    %156 = vmatprep.subr.mxu0 0.0
    %157 = vmatpush2.xpose.msra.mxu0 0.0
    %158 = vmatprep.subr.mxu0 0.0
    %159 = vmatpush2.xpose.msra.mxu0 0.0
    %160 = vmatprep.subr.mxu0 0.0
    %161 = vmatpush2.xpose.msra.mxu0 0.0
    %162 = vmatprep.subr.mxu0 0.0
    %163 = vmatpush2.xpose.msra.mxu0 0.0
    %164 = vmatprep.subr.mxu0 0.0
    %165 = vmatpush2.xpose.msra.mxu0 0.0
    %166 = vmatprep.subr.mxu0 0.0
    %167 = vmatpush2.xpose.msra.mxu0 0.0
    %168 = vmatprep.mubr.f32.mxu0 0.0
    %169 = vmatmul.mubr.f32.gmra.mxu0 %v72
    %v170 = vpop.f32.mrf.mxu0
    %v171 = vadd.f32 0.0, %v170
    %v172 = vpop.f32.mrf.mxu0
    %173 = vmatprep.mubr.f32.mxu0 0.0
    %174 = vmatmul.mubr.f32.gmra.mxu0 %v73
    %v175 = vpop.f32.mrf.mxu0
    %v176 = vadd.f32 0.0, %v175
    %v177 = vpop.f32.mrf.mxu0
    %178 = vmatprep.mubr.f32.mxu0 0.0
    %179 = vmatmul.mubr.f32.gmra.mxu0 %v74
    %v180 = vpop.f32.mrf.mxu0
    %v181 = vadd.f32 0.0, %v180
    %v182 = vpop.f32.mrf.mxu0
    %183 = vmatprep.mubr.f32.mxu0 0.0
    %184 = vmatmul.mubr.f32.gmra.mxu0 %v75
    %v185 = vpop.f32.mrf.mxu0
    %v186 = vadd.f32 0.0, %v185
    %v187 = vpop.f32.mrf.mxu0
    %188 = vmatprep.mubr.f32.mxu0 0.0
    %189 = vmatmul.mubr.f32.gmra.mxu0 %v76
    %v190 = vpop.f32.mrf.mxu0
    %v191 = vadd.f32 0.0, %v190
    %v192 = vpop.f32.mrf.mxu0
    %193 = vmatprep.mubr.f32.mxu0 0.0
    %194 = vmatmul.mubr.f32.gmra.mxu0 %v77
    %v195 = vpop.f32.mrf.mxu0
    %v196 = vadd.f32 0.0, %v195
    %v197 = vpop.f32.mrf.mxu0
    %198 = vmatprep.mubr.f32.mxu0 0.0
    %199 = vmatmul.mubr.f32.gmra.mxu0 %v78
    %v200 = vpop.f32.mrf.mxu0
    %v201 = vadd.f32 0.0, %v200
    %v202 = vpop.f32.mrf.mxu0
    %203 = vmatprep.mubr.f32.mxu0 0.0
    %204 = vmatmul.mubr.f32.gmra.mxu0 %v79
    %v205 = vpop.f32.mrf.mxu0
    %v206 = vadd.f32 0.0, %v205
    %v207 = vpop.f32.mrf.mxu0
    %208 = vmatprep.mubr.f32.mxu0 0.0
    %209 = vmatmul.mubr.f32.gmra.mxu0 %v80
    %v210 = vpop.f32.mrf.mxu0
    %v211 = vadd.f32 0.0, %v210
    %v212 = vpop.f32.mrf.mxu0
    %213 = vmatprep.mubr.f32.mxu0 0.0
    %214 = vmatmul.mubr.f32.gmra.mxu0 %v81
    %v215 = vpop.f32.mrf.mxu0
    %v216 = vadd.f32 0.0, %v215
    %v217 = vpop.f32.mrf.mxu0
    %218 = vmatprep.mubr.f32.mxu0 0.0
    %219 = vmatmul.mubr.f32.gmra.mxu0 %v82
    %v220 = vpop.f32.mrf.mxu0
    %v221 = vadd.f32 0.0, %v220
    %v222 = vpop.f32.mrf.mxu0
    %223 = vmatprep.mubr.f32.mxu0 0.0
    %224 = vmatmul.mubr.f32.gmra.mxu0 %v83
    %v225 = vpop.f32.mrf.mxu0
    %v226 = vadd.f32 0.0, %v225
    %v227 = vpop.f32.mrf.mxu0
    %228 = vmatprep.mubr.f32.mxu0 0.0
    %229 = vmatmul.mubr.f32.gmra.mxu0 %v84
    %v230 = vpop.f32.mrf.mxu0
    %v231 = vadd.f32 0.0, %v230
    %v232 = vpop.f32.mrf.mxu0
    %233 = vmatprep.mubr.f32.mxu0 0.0
    %234 = vmatmul.mubr.f32.gmra.mxu0 %v85
    %v235 = vpop.f32.mrf.mxu0
    %v236 = vadd.f32 0.0, %v235
    %v237 = vpop.f32.mrf.mxu0
    %238 = vmatprep.mubr.f32.mxu0 0.0
    %239 = vmatmul.mubr.f32.gmra.mxu0 %v86
    %v240 = vpop.f32.mrf.mxu0
    %v241 = vadd.f32 0.0, %v240
    %v242 = vpop.f32.mrf.mxu0
    %243 = vmatprep.mubr.f32.mxu0 0.0
    %244 = vmatmul.mubr.f32.gmra.mxu0 %v87
    %v245 = vpop.f32.mrf.mxu0
    %v246 = vadd.f32 0.0, %v245
    %v247 = vpop.f32.mrf.mxu0
    %248 = vdwg.mxu0
    %v249 = vadd.f32 %v88, %v171
    %v250 = vadd.f32 %v89, %v176
    %v251 = vadd.f32 %v90, %v181
    %v252 = vadd.f32 %v91, %v186
    %v253 = vadd.f32 %v92, %v191
    %v254 = vadd.f32 %v93, %v196
    %v255 = vadd.f32 %v94, %v201
    %v256 = vadd.f32 %v95, %v206
    %v257 = vadd.f32 %v96, %v211
    %v258 = vadd.f32 %v97, %v216
    %v259 = vadd.f32 %v98, %v221
    %v260 = vadd.f32 %v99, %v226
    %v261 = vadd.f32 %v100, %v231
    %v262 = vadd.f32 %v101, %v236
    %v263 = vadd.f32 %v102, %v241
    %v264 = vadd.f32 %v103, %v246
    %265 = vst [vmem:[#allocation2] sm:$0xff] %v249
    %266 = vst [vmem:[#allocation2 + $0x8] sm:$0xff] %v250
    %267 = vst [vmem:[#allocation2 + $0x10] sm:$0xff] %v251
    %268 = vst [vmem:[#allocation2 + $0x18] sm:$0xff] %v252
    %269 = vst [vmem:[#allocation2 + $0x20] sm:$0xff] %v253
    %270 = vst [vmem:[#allocation2 + $0x28] sm:$0xff] %v254
    %271 = vst [vmem:[#allocation2 + $0x30] sm:$0xff] %v255
    %272 = vst [vmem:[#allocation2 + $0x38] sm:$0xff] %v256
    %273 = vst [vmem:[#allocation2 + $0x40] sm:$0xff] %v257
    %274 = vst [vmem:[#allocation2 + $0x48] sm:$0xff] %v258
    %275 = vst [vmem:[#allocation2 + $0x50] sm:$0xff] %v259
    %276 = vst [vmem:[#allocation2 + $0x58] sm:$0xff] %v260
    %277 = vst [vmem:[#allocation2 + $0x60] sm:$0xff] %v261
    %278 = vst [vmem:[#allocation2 + $0x68] sm:$0xff] %v262
    %279 = vst [vmem:[#allocation2 + $0x70] sm:$0xff] %v263
    %280 = vst [vmem:[#allocation2 + $0x78] sm:$0xff] %v264
    %v281 = vld [vmem:[#allocation3] sm:$0xff]
    %v282 = vld [vmem:[#allocation3 + $0x8] sm:$0xff]
    %v283 = vld [vmem:[#allocation3 + $0x10] sm:$0xff]
    %v284 = vld [vmem:[#allocation3 + $0x18] sm:$0xff]
    %v285 = vld [vmem:[#allocation3 + $0x20] sm:$0xff]
    %v286 = vld [vmem:[#allocation3 + $0x28] sm:$0xff]
    %v287 = vld [vmem:[#allocation3 + $0x30] sm:$0xff]
    %v288 = vld [vmem:[#allocation3 + $0x38] sm:$0xff]
    %v289 = vld [vmem:[#allocation3 + $0x40] sm:$0xff]
    %v290 = vld [vmem:[#allocation3 + $0x48] sm:$0xff]
    %v291 = vld [vmem:[#allocation3 + $0x50] sm:$0xff]
    %v292 = vld [vmem:[#allocation3 + $0x58] sm:$0xff]
    %v293 = vld [vmem:[#allocation3 + $0x60] sm:$0xff]
    %v294 = vld [vmem:[#allocation3 + $0x68] sm:$0xff]
    %v295 = vld [vmem:[#allocation3 + $0x70] sm:$0xff]
    %v296 = vld [vmem:[#allocation3 + $0x78] sm:$0xff]
    %v297 = vmul.f32 %v72, %v72
    %v298 = vmul.f32 %v73, %v73
    %v299 = vmul.f32 %v74, %v74
    %v300 = vmul.f32 %v75, %v75
    %v301 = vmul.f32 %v76, %v76
    %v302 = vmul.f32 %v77, %v77
    %v303 = vmul.f32 %v78, %v78
    %v304 = vmul.f32 %v79, %v79
    %v305 = vmul.f32 %v80, %v80
    %v306 = vmul.f32 %v81, %v81
    %v307 = vmul.f32 %v82, %v82
    %v308 = vmul.f32 %v83, %v83
    %v309 = vmul.f32 %v84, %v84
    %v310 = vmul.f32 %v85, %v85
    %v311 = vmul.f32 %v86, %v86
    %v312 = vmul.f32 %v87, %v87
    %313 = vadd.xlane.f32.xlu0 %v297
    %v314 = vpop.xlane.xlu0 %313
    %315 = vadd.xlane.f32.xlu0 %v298
    %v316 = vpop.xlane.xlu0 %315
    %317 = vadd.xlane.f32.xlu0 %v299
    %v318 = vpop.xlane.xlu0 %317
    %319 = vadd.xlane.f32.xlu0 %v300
    %v320 = vpop.xlane.xlu0 %319
    %321 = vadd.xlane.f32.xlu0 %v301
    %v322 = vpop.xlane.xlu0 %321
    %323 = vadd.xlane.f32.xlu0 %v302
    %v324 = vpop.xlane.xlu0 %323
    %325 = vadd.xlane.f32.xlu0 %v303
    %v326 = vpop.xlane.xlu0 %325
    %327 = vadd.xlane.f32.xlu0 %v304
    %v328 = vpop.xlane.xlu0 %327
    %329 = vadd.xlane.f32.xlu0 %v305
    %v330 = vpop.xlane.xlu0 %329
    %331 = vadd.xlane.f32.xlu0 %v306
    %v332 = vpop.xlane.xlu0 %331
    %333 = vadd.xlane.f32.xlu0 %v307
    %v334 = vpop.xlane.xlu0 %333
    %335 = vadd.xlane.f32.xlu0 %v308
    %v336 = vpop.xlane.xlu0 %335
    %337 = vadd.xlane.f32.xlu0 %v309
    %v338 = vpop.xlane.xlu0 %337
    %339 = vadd.xlane.f32.xlu0 %v310
    %v340 = vpop.xlane.xlu0 %339
    %341 = vadd.xlane.f32.xlu0 %v311
    %v342 = vpop.xlane.xlu0 %341
    %343 = vadd.xlane.f32.xlu0 %v312
    %v344 = vpop.xlane.xlu0 %343
    %v345 = vadd.f32 %v281, %v314
    %v346 = vadd.f32 %v282, %v316
    %v347 = vadd.f32 %v283, %v318
    %v348 = vadd.f32 %v284, %v320
    %v349 = vadd.f32 %v285, %v322
    %v350 = vadd.f32 %v286, %v324
    %v351 = vadd.f32 %v287, %v326
    %v352 = vadd.f32 %v288, %v328
    %v353 = vadd.f32 %v289, %v330
    %v354 = vadd.f32 %v290, %v332
    %v355 = vadd.f32 %v291, %v334
    %v356 = vadd.f32 %v292, %v336
    %v357 = vadd.f32 %v293, %v338
    %v358 = vadd.f32 %v294, %v340
    %v359 = vadd.f32 %v295, %v342
    %v360 = vadd.f32 %v296, %v344
    %vm361 = vcmask 7168
    %362 = vst.msk [vmem:[#allocation3] sm:$0xff] %vm361, %v345
    %363 = vst.msk [vmem:[#allocation3 + $0x8] sm:$0xff] %vm361, %v346
    %364 = vst.msk [vmem:[#allocation3 + $0x10] sm:$0xff] %vm361, %v347
    %365 = vst.msk [vmem:[#allocation3 + $0x18] sm:$0xff] %vm361, %v348
    %366 = vst.msk [vmem:[#allocation3 + $0x20] sm:$0xff] %vm361, %v349
    %367 = vst.msk [vmem:[#allocation3 + $0x28] sm:$0xff] %vm361, %v350
    %368 = vst.msk [vmem:[#allocation3 + $0x30] sm:$0xff] %vm361, %v351
    %369 = vst.msk [vmem:[#allocation3 + $0x38] sm:$0xff] %vm361, %v352
    %370 = vst.msk [vmem:[#allocation3 + $0x40] sm:$0xff] %vm361, %v353
    %371 = vst.msk [vmem:[#allocation3 + $0x48] sm:$0xff] %vm361, %v354
    %372 = vst.msk [vmem:[#allocation3 + $0x50] sm:$0xff] %vm361, %v355
    %373 = vst.msk [vmem:[#allocation3 + $0x58] sm:$0xff] %vm361, %v356
    %374 = vst.msk [vmem:[#allocation3 + $0x60] sm:$0xff] %vm361, %v357
    %375 = vst.msk [vmem:[#allocation3 + $0x68] sm:$0xff] %vm361, %v358
    %376 = vst.msk [vmem:[#allocation3 + $0x70] sm:$0xff] %vm361, %v359
    %377 = vst.msk [vmem:[#allocation3 + $0x78] sm:$0xff] %vm361, %v360
    %v378 = vmul.f32 %v54, %v54
    %v379 = vmul.f32 %v55, %v55
    %v380 = vmul.f32 %v56, %v56
    %v381 = vmul.f32 %v57, %v57
    %v382 = vmul.f32 %v58, %v58
    %v383 = vmul.f32 %v59, %v59
    %v384 = vmul.f32 %v60, %v60
    %v385 = vmul.f32 %v61, %v61
    %v386 = vmul.f32 %v62, %v62
    %v387 = vmul.f32 %v63, %v63
    %v388 = vmul.f32 %v64, %v64
    %v389 = vmul.f32 %v65, %v65
    %v390 = vmul.f32 %v66, %v66
    %v391 = vmul.f32 %v67, %v67
    %v392 = vmul.f32 %v68, %v68
    %v393 = vmul.f32 %v69, %v69
    %v394 = vld [vmem:[#allocation4] sm:$0x1]
    %395 = vmatprep.subr.mxu0 0.0
    %396 = vmatpush1.xpose.msra.mxu0 %v393
    %397 = vmatprep.subr.mxu0 0.0
    %398 = vmatpush1.xpose.msra.mxu0 %v392
    %399 = vmatprep.subr.mxu0 0.0
    %400 = vmatpush1.xpose.msra.mxu0 %v391
    %401 = vmatprep.subr.mxu0 0.0
    %402 = vmatpush1.xpose.msra.mxu0 %v390
    %403 = vmatprep.subr.mxu0 0.0
    %404 = vmatpush1.xpose.msra.mxu0 %v389
    %405 = vmatprep.subr.mxu0 0.0
    %406 = vmatpush1.xpose.msra.mxu0 %v388
    %407 = vmatprep.subr.mxu0 0.0
    %408 = vmatpush1.xpose.msra.mxu0 %v387
    %409 = vmatprep.subr.mxu0 0.0
    %410 = vmatpush1.xpose.msra.mxu0 %v386
    %411 = vmatprep.subr.mxu0 0.0
    %412 = vmatpush1.xpose.msra.mxu0 %v385
    %413 = vmatprep.subr.mxu0 0.0
    %414 = vmatpush1.xpose.msra.mxu0 %v384
    %415 = vmatprep.subr.mxu0 0.0
    %416 = vmatpush1.xpose.msra.mxu0 %v383
    %417 = vmatprep.subr.mxu0 0.0
    %418 = vmatpush1.xpose.msra.mxu0 %v382
    %419 = vmatprep.subr.mxu0 0.0
    %420 = vmatpush1.xpose.msra.mxu0 %v381
    %421 = vmatprep.subr.mxu0 0.0
    %422 = vmatpush1.xpose.msra.mxu0 %v380
    %423 = vmatprep.subr.mxu0 0.0
    %424 = vmatpush1.xpose.msra.mxu0 %v379
    %425 = vmatprep.subr.mxu0 0.0
    %426 = vmatpush1.xpose.msra.mxu0 %v378
    %427 = vmatprep.subr.mxu0 0.0
    %428 = vmatpush2.xpose.msra.mxu0 0.0
    %429 = vmatprep.subr.mxu0 0.0
    %430 = vmatpush2.xpose.msra.mxu0 0.0
    %431 = vmatprep.subr.mxu0 0.0
    %432 = vmatpush2.xpose.msra.mxu0 0.0
    %433 = vmatprep.subr.mxu0 0.0
    %434 = vmatpush2.xpose.msra.mxu0 0.0
    %435 = vmatprep.subr.mxu0 0.0
    %436 = vmatpush2.xpose.msra.mxu0 0.0
    %437 = vmatprep.subr.mxu0 0.0
    %438 = vmatpush2.xpose.msra.mxu0 0.0
    %439 = vmatprep.subr.mxu0 0.0
    %440 = vmatpush2.xpose.msra.mxu0 0.0
    %441 = vmatprep.subr.mxu0 0.0
    %442 = vmatpush2.xpose.msra.mxu0 0.0
    %443 = vmatprep.subr.mxu0 0.0
    %444 = vmatpush2.xpose.msra.mxu0 0.0
    %445 = vmatprep.subr.mxu0 0.0
    %446 = vmatpush2.xpose.msra.mxu0 0.0
    %447 = vmatprep.subr.mxu0 0.0
    %448 = vmatpush2.xpose.msra.mxu0 0.0
    %449 = vmatprep.subr.mxu0 0.0
    %450 = vmatpush2.xpose.msra.mxu0 0.0
    %451 = vmatprep.subr.mxu0 0.0
    %452 = vmatpush2.xpose.msra.mxu0 0.0
    %453 = vmatprep.subr.mxu0 0.0
    %454 = vmatpush2.xpose.msra.mxu0 0.0
    %455 = vmatprep.subr.mxu0 0.0
    %456 = vmatpush2.xpose.msra.mxu0 0.0
    %457 = vmatprep.subr.mxu0 0.0
    %458 = vmatpush2.xpose.msra.mxu0 0.0
    %459 = vmatprep.mubr.f32.mxu0 0.0
    %460 = vmatmul.mubr.f32.gmra.mxu0 1.0
    %v461 = vpop.f32.mrf.mxu0
    %v462 = vadd.f32 0.0, %v461
    %v463 = vpop.f32.mrf.mxu0
    %464 = vdwg.mxu0
    %v465 = vadd.f32 %v394, %v462
    %466 = vst [vmem:[#allocation4] sm:$0x1] %v465
    // Predicated region
    $region18: #{tpu_custom_call.1} parent=1 // pred_check
      %p467 = pneg %p15
    $region19: #{tpu_custom_call.1} parent=1 // pred_check_branch
      %469 = sbr.rel (%p467) target = $region21
    $region20: #{tpu_custom_call.1} parent=1 // pred_region
      %v470 = vld [vmem:[#allocation2] sm:$0xff]
      %v471 = vld [vmem:[#allocation2 + $0x8] sm:$0xff]
      %v472 = vld [vmem:[#allocation2 + $0x10] sm:$0xff]
      %v473 = vld [vmem:[#allocation2 + $0x18] sm:$0xff]
      %v474 = vld [vmem:[#allocation2 + $0x20] sm:$0xff]
      %v475 = vld [vmem:[#allocation2 + $0x28] sm:$0xff]
      %v476 = vld [vmem:[#allocation2 + $0x30] sm:$0xff]
      %v477 = vld [vmem:[#allocation2 + $0x38] sm:$0xff]
      %v478 = vld [vmem:[#allocation2 + $0x40] sm:$0xff]
      %v479 = vld [vmem:[#allocation2 + $0x48] sm:$0xff]
      %v480 = vld [vmem:[#allocation2 + $0x50] sm:$0xff]
      %v481 = vld [vmem:[#allocation2 + $0x58] sm:$0xff]
      %v482 = vld [vmem:[#allocation2 + $0x60] sm:$0xff]
      %v483 = vld [vmem:[#allocation2 + $0x68] sm:$0xff]
      %v484 = vld [vmem:[#allocation2 + $0x70] sm:$0xff]
      %v485 = vld [vmem:[#allocation2 + $0x78] sm:$0xff]
      %v486 = vld [vmem:[#allocation3] sm:$0xff]
      %v487 = vld [vmem:[#allocation3 + $0x8] sm:$0xff]
      %v488 = vld [vmem:[#allocation3 + $0x10] sm:$0xff]
      %v489 = vld [vmem:[#allocation3 + $0x18] sm:$0xff]
      %v490 = vld [vmem:[#allocation3 + $0x20] sm:$0xff]
      %v491 = vld [vmem:[#allocation3 + $0x28] sm:$0xff]
      %v492 = vld [vmem:[#allocation3 + $0x30] sm:$0xff]
      %v493 = vld [vmem:[#allocation3 + $0x38] sm:$0xff]
      %v494 = vld [vmem:[#allocation3 + $0x40] sm:$0xff]
      %v495 = vld [vmem:[#allocation3 + $0x48] sm:$0xff]
      %v496 = vld [vmem:[#allocation3 + $0x50] sm:$0xff]
      %v497 = vld [vmem:[#allocation3 + $0x58] sm:$0xff]
      %v498 = vld [vmem:[#allocation3 + $0x60] sm:$0xff]
      %v499 = vld [vmem:[#allocation3 + $0x68] sm:$0xff]
      %v500 = vld [vmem:[#allocation3 + $0x70] sm:$0xff]
      %v501 = vld [vmem:[#allocation3 + $0x78] sm:$0xff]
      %v502 = vmax.f32 %v486, 1e-24
      %v503 = vmax.f32 %v487, 1e-24
      %v504 = vmax.f32 %v488, 1e-24
      %v505 = vmax.f32 %v489, 1e-24
      %v506 = vmax.f32 %v490, 1e-24
      %v507 = vmax.f32 %v491, 1e-24
      %v508 = vmax.f32 %v492, 1e-24
      %v509 = vmax.f32 %v493, 1e-24
      %v510 = vmax.f32 %v494, 1e-24
      %v511 = vmax.f32 %v495, 1e-24
      %v512 = vmax.f32 %v496, 1e-24
      %v513 = vmax.f32 %v497, 1e-24
      %v514 = vmax.f32 %v498, 1e-24
      %v515 = vmax.f32 %v499, 1e-24
      %v516 = vmax.f32 %v500, 1e-24
      %v517 = vmax.f32 %v501, 1e-24
      %v518 = vrsqrt.pop %v502
      %v519 = vrsqrt.pop %v503
      %v520 = vrsqrt.pop %v504
      %v521 = vrsqrt.pop %v505
      %v522 = vrsqrt.pop %v506
      %v523 = vrsqrt.pop %v507
      %v524 = vrsqrt.pop %v508
      %v525 = vrsqrt.pop %v509
      %v526 = vrsqrt.pop %v510
      %v527 = vrsqrt.pop %v511
      %v528 = vrsqrt.pop %v512
      %v529 = vrsqrt.pop %v513
      %v530 = vrsqrt.pop %v514
      %v531 = vrsqrt.pop %v515
      %v532 = vrsqrt.pop %v516
      %v533 = vrsqrt.pop %v517
      %v534 = vld [vmem:[#allocation4] sm:$0x1]
      %v535 = vmax.f32 %v534, 1e-24
      %v536 = vrsqrt.pop %v535
      %538 = vset.pattern.permute.xlu0 0
      %539 = vperm.xlu0 %538, %v518
      %v540 = vpop.permute.xlu0 %539
      %543 = vset.pattern.permute.xlu0 0
      %544 = vperm.xlu0 %543, %v519
      %v545 = vpop.permute.xlu0 %544
      %548 = vset.pattern.permute.xlu0 0
      %549 = vperm.xlu0 %548, %v520
      %v550 = vpop.permute.xlu0 %549
      %553 = vset.pattern.permute.xlu0 0
      %554 = vperm.xlu0 %553, %v521
      %v555 = vpop.permute.xlu0 %554
      %558 = vset.pattern.permute.xlu0 0
      %559 = vperm.xlu0 %558, %v522
      %v560 = vpop.permute.xlu0 %559
      %563 = vset.pattern.permute.xlu0 0
      %564 = vperm.xlu0 %563, %v523
      %v565 = vpop.permute.xlu0 %564
      %568 = vset.pattern.permute.xlu0 0
      %569 = vperm.xlu0 %568, %v524
      %v570 = vpop.permute.xlu0 %569
      %573 = vset.pattern.permute.xlu0 0
      %574 = vperm.xlu0 %573, %v525
      %v575 = vpop.permute.xlu0 %574
      %578 = vset.pattern.permute.xlu0 0
      %579 = vperm.xlu0 %578, %v526
      %v580 = vpop.permute.xlu0 %579
      %583 = vset.pattern.permute.xlu0 0
      %584 = vperm.xlu0 %583, %v527
      %v585 = vpop.permute.xlu0 %584
      %588 = vset.pattern.permute.xlu0 0
      %589 = vperm.xlu0 %588, %v528
      %v590 = vpop.permute.xlu0 %589
      %593 = vset.pattern.permute.xlu0 0
      %594 = vperm.xlu0 %593, %v529
      %v595 = vpop.permute.xlu0 %594
      %598 = vset.pattern.permute.xlu0 0
      %599 = vperm.xlu0 %598, %v530
      %v600 = vpop.permute.xlu0 %599
      %603 = vset.pattern.permute.xlu0 0
      %604 = vperm.xlu0 %603, %v531
      %v605 = vpop.permute.xlu0 %604
      %608 = vset.pattern.permute.xlu0 0
      %609 = vperm.xlu0 %608, %v532
      %v610 = vpop.permute.xlu0 %609
      %613 = vset.pattern.permute.xlu0 0
      %614 = vperm.xlu0 %613, %v533
      %v615 = vpop.permute.xlu0 %614
      %v617 = vmul.f32 %v470, %v540
      %v618 = vmul.f32 %v471, %v545
      %v619 = vmul.f32 %v472, %v550
      %v620 = vmul.f32 %v473, %v555
      %v621 = vmul.f32 %v474, %v560
      %v622 = vmul.f32 %v475, %v565
      %v623 = vmul.f32 %v476, %v570
      %v624 = vmul.f32 %v477, %v575
      %v625 = vmul.f32 %v478, %v580
      %v626 = vmul.f32 %v479, %v585
      %v627 = vmul.f32 %v480, %v590
      %v628 = vmul.f32 %v481, %v595
      %v629 = vmul.f32 %v482, %v600
      %v630 = vmul.f32 %v483, %v605
      %v631 = vmul.f32 %v484, %v610
      %v632 = vmul.f32 %v485, %v615
      %v634 = vlaneseq
      %v635 = vshrl.u32 %v634, 7
      %v636 = vsub.s32 0, %v635
      %v637 = vrot.slane %v536, %v636
      %v639 = vmul.f32 %v617, %v637
      %v640 = vmul.f32 %v618, %v637
      %v641 = vmul.f32 %v619, %v637
      %v642 = vmul.f32 %v620, %v637
      %v643 = vmul.f32 %v621, %v637
      %v644 = vmul.f32 %v622, %v637
      %v645 = vmul.f32 %v623, %v637
      %v646 = vmul.f32 %v624, %v637
      %v647 = vmul.f32 %v625, %v637
      %v648 = vmul.f32 %v626, %v637
      %v649 = vmul.f32 %v627, %v637
      %v650 = vmul.f32 %v628, %v637
      %v651 = vmul.f32 %v629, %v637
      %v652 = vmul.f32 %v630, %v637
      %v653 = vmul.f32 %v631, %v637
      %v654 = vmul.f32 %v632, %v637
      %v655 = vld [vmem:[%s0] sm:$0xff]
      %v656 = vld [vmem:[%s0 + $0x8] sm:$0xff]
      %v657 = vld [vmem:[%s0 + $0x10] sm:$0xff]
      %v658 = vld [vmem:[%s0 + $0x18] sm:$0xff]
      %v659 = vld [vmem:[%s0 + $0x20] sm:$0xff]
      %v660 = vld [vmem:[%s0 + $0x28] sm:$0xff]
      %v661 = vld [vmem:[%s0 + $0x30] sm:$0xff]
      %v662 = vld [vmem:[%s0 + $0x38] sm:$0xff]
      %v663 = vld [vmem:[%s0 + $0x40] sm:$0xff]
      %v664 = vld [vmem:[%s0 + $0x48] sm:$0xff]
      %v665 = vld [vmem:[%s0 + $0x50] sm:$0xff]
      %v666 = vld [vmem:[%s0 + $0x58] sm:$0xff]
      %v667 = vld [vmem:[%s0 + $0x60] sm:$0xff]
      %v668 = vld [vmem:[%s0 + $0x68] sm:$0xff]
      %v669 = vld [vmem:[%s0 + $0x70] sm:$0xff]
      %v670 = vld [vmem:[%s0 + $0x78] sm:$0xff]
      %v671 = vld [vmem:[%s1] sm:$0x1]
      %672 = vset.pattern.permute.xlu0 0
      %673 = vperm.xlu0 %672, %v655
      %v674 = vpop.permute.xlu0 %673
      %675 = vset.pattern.permute.xlu0 0
      %676 = vperm.xlu0 %675, %v656
      %v677 = vpop.permute.xlu0 %676
      %678 = vset.pattern.permute.xlu0 0
      %679 = vperm.xlu0 %678, %v657
      %v680 = vpop.permute.xlu0 %679
      %681 = vset.pattern.permute.xlu0 0
      %682 = vperm.xlu0 %681, %v658
      %v683 = vpop.permute.xlu0 %682
      %684 = vset.pattern.permute.xlu0 0
      %685 = vperm.xlu0 %684, %v659
      %v686 = vpop.permute.xlu0 %685
      %687 = vset.pattern.permute.xlu0 0
      %688 = vperm.xlu0 %687, %v660
      %v689 = vpop.permute.xlu0 %688
      %690 = vset.pattern.permute.xlu0 0
      %691 = vperm.xlu0 %690, %v661
      %v692 = vpop.permute.xlu0 %691
      %693 = vset.pattern.permute.xlu0 0
      %694 = vperm.xlu0 %693, %v662
      %v695 = vpop.permute.xlu0 %694
      %696 = vset.pattern.permute.xlu0 0
      %697 = vperm.xlu0 %696, %v663
      %v698 = vpop.permute.xlu0 %697
      %699 = vset.pattern.permute.xlu0 0
      %700 = vperm.xlu0 %699, %v664
      %v701 = vpop.permute.xlu0 %700
      %702 = vset.pattern.permute.xlu0 0
      %703 = vperm.xlu0 %702, %v665
      %v704 = vpop.permute.xlu0 %703
      %705 = vset.pattern.permute.xlu0 0
      %706 = vperm.xlu0 %705, %v666
      %v707 = vpop.permute.xlu0 %706
      %708 = vset.pattern.permute.xlu0 0
      %709 = vperm.xlu0 %708, %v667
      %v710 = vpop.permute.xlu0 %709
      %711 = vset.pattern.permute.xlu0 0
      %712 = vperm.xlu0 %711, %v668
      %v713 = vpop.permute.xlu0 %712
      %714 = vset.pattern.permute.xlu0 0
      %715 = vperm.xlu0 %714, %v669
      %v716 = vpop.permute.xlu0 %715
      %717 = vset.pattern.permute.xlu0 0
      %718 = vperm.xlu0 %717, %v670
      %v719 = vpop.permute.xlu0 %718
      %v720 = vlaneseq
      %v721 = vshrl.u32 %v720, 7
      %v722 = vsub.s32 0, %v721
      %v723 = vrot.slane %v671, %v722
      %vm724 = vcmp.eq.s32.totalorder %v674, %v723
      %vm725 = vcmp.eq.s32.totalorder %v677, %v723
      %vm726 = vcmp.eq.s32.totalorder %v680, %v723
      %vm727 = vcmp.eq.s32.totalorder %v683, %v723
      %vm728 = vcmp.eq.s32.totalorder %v686, %v723
      %vm729 = vcmp.eq.s32.totalorder %v689, %v723
      %vm730 = vcmp.eq.s32.totalorder %v692, %v723
      %vm731 = vcmp.eq.s32.totalorder %v695, %v723
      %vm732 = vcmp.eq.s32.totalorder %v698, %v723
      %vm733 = vcmp.eq.s32.totalorder %v701, %v723
      %vm734 = vcmp.eq.s32.totalorder %v704, %v723
      %vm735 = vcmp.eq.s32.totalorder %v707, %v723
      %vm736 = vcmp.eq.s32.totalorder %v710, %v723
      %vm737 = vcmp.eq.s32.totalorder %v713, %v723
      %vm738 = vcmp.eq.s32.totalorder %v716, %v723
      %vm739 = vcmp.eq.s32.totalorder %v719, %v723
      %v740 = vlaneseq
      %v741 = vshrl.u32 %v740, 7
      %v742 = vadd.s32 %v741, 8
      %v743 = vadd.s32 %v741, 16
      %v744 = vadd.s32 %v741, 24
      %v745 = vadd.s32 %v741, 32
      %v746 = vadd.s32 %v741, 40
      %v747 = vadd.s32 %v741, 48
      %v748 = vadd.s32 %v741, 56
      %v749 = vadd.s32 %v741, 64
      %v750 = vadd.s32 %v741, 72
      %v751 = vadd.s32 %v741, 80
      %v752 = vadd.s32 %v741, 88
      %v753 = vadd.s32 %v741, 96
      %v754 = vadd.s32 %v741, 104
      %v755 = vadd.s32 %v741, 112
      %v756 = vadd.s32 %v741, 120
      %v757 = vstv %s70
      %v758 = vadd.s32 %v741, %v757
      %v759 = vadd.s32 %v742, %v757
      %v760 = vadd.s32 %v743, %v757
      %v761 = vadd.s32 %v744, %v757
      %v762 = vadd.s32 %v745, %v757
      %v763 = vadd.s32 %v746, %v757
      %v764 = vadd.s32 %v747, %v757
      %v765 = vadd.s32 %v748, %v757
      %v766 = vadd.s32 %v749, %v757
      %v767 = vadd.s32 %v750, %v757
      %v768 = vadd.s32 %v751, %v757
      %v769 = vadd.s32 %v752, %v757
      %v770 = vadd.s32 %v753, %v757
      %v771 = vadd.s32 %v754, %v757
      %v772 = vadd.s32 %v755, %v757
      %v773 = vadd.s32 %v756, %v757
      %v774 = vlaneseq
      %v775 = vand.u32 %v774, 127
      %vm776 = vcmp.ne.s32.totalorder %v758, %v775
      %vm777 = vcmp.ne.s32.totalorder %v759, %v775
      %vm778 = vcmp.ne.s32.totalorder %v760, %v775
      %vm779 = vcmp.ne.s32.totalorder %v761, %v775
      %vm780 = vcmp.ne.s32.totalorder %v762, %v775
      %vm781 = vcmp.ne.s32.totalorder %v763, %v775
      %vm782 = vcmp.ne.s32.totalorder %v764, %v775
      %vm783 = vcmp.ne.s32.totalorder %v765, %v775
      %vm784 = vcmp.ne.s32.totalorder %v766, %v775
      %vm785 = vcmp.ne.s32.totalorder %v767, %v775
      %vm786 = vcmp.ne.s32.totalorder %v768, %v775
      %vm787 = vcmp.ne.s32.totalorder %v769, %v775
      %vm788 = vcmp.ne.s32.totalorder %v770, %v775
      %vm789 = vcmp.ne.s32.totalorder %v771, %v775
      %vm790 = vcmp.ne.s32.totalorder %v772, %v775
      %vm791 = vcmp.ne.s32.totalorder %v773, %v775
      %vm792 = vmand %vm724, %vm776
      %vm793 = vmand %vm725, %vm777
      %vm794 = vmand %vm726, %vm778
      %vm795 = vmand %vm727, %vm779
      %vm796 = vmand %vm728, %vm780
      %vm797 = vmand %vm729, %vm781
      %vm798 = vmand %vm730, %vm782
      %vm799 = vmand %vm731, %vm783
      %vm800 = vmand %vm732, %vm784
      %vm801 = vmand %vm733, %vm785
      %vm802 = vmand %vm734, %vm786
      %vm803 = vmand %vm735, %vm787
      %vm804 = vmand %vm736, %vm788
      %vm805 = vmand %vm737, %vm789
      %vm806 = vmand %vm738, %vm790
      %vm807 = vmand %vm739, %vm791
      %v808 = vsel %vm792, %v639, 0.0
      %v809 = vsel %vm793, %v640, 0.0
      %v810 = vsel %vm794, %v641, 0.0
      %v811 = vsel %vm795, %v642, 0.0
      %v812 = vsel %vm796, %v643, 0.0
      %v813 = vsel %vm797, %v644, 0.0
      %v814 = vsel %vm798, %v645, 0.0
      %v815 = vsel %vm799, %v646, 0.0
      %v816 = vsel %vm800, %v647, 0.0
      %v817 = vsel %vm801, %v648, 0.0
      %v818 = vsel %vm802, %v649, 0.0
      %v819 = vsel %vm803, %v650, 0.0
      %v820 = vsel %vm804, %v651, 0.0
      %v821 = vsel %vm805, %v652, 0.0
      %v822 = vsel %vm806, %v653, 0.0
      %v823 = vsel %vm807, %v654, 0.0
      %v824 = vadd.f32 %v808, %v809
      %v825 = vadd.f32 %v824, %v810
      %v826 = vadd.f32 %v825, %v811
      %v827 = vadd.f32 %v826, %v812
      %v828 = vadd.f32 %v827, %v813
      %v829 = vadd.f32 %v828, %v814
      %v830 = vadd.f32 %v829, %v815
      %v831 = vadd.f32 %v830, %v816
      %v832 = vadd.f32 %v831, %v817
      %v833 = vadd.f32 %v832, %v818
      %v834 = vadd.f32 %v833, %v819
      %v835 = vadd.f32 %v834, %v820
      %v836 = vadd.f32 %v835, %v821
      %v837 = vadd.f32 %v836, %v822
      %v838 = vadd.f32 %v837, %v823
      %839 = vadd.xlane.f32.xlu0 %v838
      %v840 = vpop.xlane.xlu0 %839
      %v841 = vrot.slane %v840, 4
      %v842 = vadd.f32 %v840, %v841
      %v843 = vrot.slane %v842, 2
      %v844 = vadd.f32 %v842, %v843
      %v845 = vrot.slane %v844, 1
      %v846 = vadd.f32 %v844, %v845
      %s847 = vtos %v846
      %v848 = vand.u32 2147483647, %v639
      %v849 = vand.u32 2147483647, %v640
      %v850 = vand.u32 2147483647, %v641
      %v851 = vand.u32 2147483647, %v642
      %v852 = vand.u32 2147483647, %v643
      %v853 = vand.u32 2147483647, %v644
      %v854 = vand.u32 2147483647, %v645
      %v855 = vand.u32 2147483647, %v646
      %v856 = vand.u32 2147483647, %v647
      %v857 = vand.u32 2147483647, %v648
      %v858 = vand.u32 2147483647, %v649
      %v859 = vand.u32 2147483647, %v650
      %v860 = vand.u32 2147483647, %v651
      %v861 = vand.u32 2147483647, %v652
      %v862 = vand.u32 2147483647, %v653
      %v863 = vand.u32 2147483647, %v654
      %v864 = vsel %vm724, 0.0, %v848
      %v865 = vsel %vm725, 0.0, %v849
      %v866 = vsel %vm726, 0.0, %v850
      %v867 = vsel %vm727, 0.0, %v851
      %v868 = vsel %vm728, 0.0, %v852
      %v869 = vsel %vm729, 0.0, %v853
      %v870 = vsel %vm730, 0.0, %v854
      %v871 = vsel %vm731, 0.0, %v855
      %v872 = vsel %vm732, 0.0, %v856
      %v873 = vsel %vm733, 0.0, %v857
      %v874 = vsel %vm734, 0.0, %v858
      %v875 = vsel %vm735, 0.0, %v859
      %v876 = vsel %vm736, 0.0, %v860
      %v877 = vsel %vm737, 0.0, %v861
      %v878 = vsel %vm738, 0.0, %v862
      %v879 = vsel %vm739, 0.0, %v863
      %v880 = vadd.f32 %v864, %v865
      %v881 = vadd.f32 %v880, %v866
      %v882 = vadd.f32 %v881, %v867
      %v883 = vadd.f32 %v882, %v868
      %v884 = vadd.f32 %v883, %v869
      %v885 = vadd.f32 %v884, %v870
      %v886 = vadd.f32 %v885, %v871
      %v887 = vadd.f32 %v886, %v872
      %v888 = vadd.f32 %v887, %v873
      %v889 = vadd.f32 %v888, %v874
      %v890 = vadd.f32 %v889, %v875
      %v891 = vadd.f32 %v890, %v876
      %v892 = vadd.f32 %v891, %v877
      %v893 = vadd.f32 %v892, %v878
      %v894 = vadd.f32 %v893, %v879
      %895 = vadd.xlane.f32.xlu0 %v894
      %v896 = vpop.xlane.xlu0 %895
      %v897 = vrot.slane %v896, 4
      %v898 = vadd.f32 %v896, %v897
      %v899 = vrot.slane %v898, 2
      %v900 = vadd.f32 %v898, %v899
      %v901 = vrot.slane %v900, 1
      %v902 = vadd.f32 %v900, %v901
      %s903 = vtos %v902
      %vm904 = vcmp.eq.s32.totalorder %v775, 0
      %vm905 = vcmp.eq.s32.totalorder %v775, 1
      %v906 = vstv %s903
      %v907 = vsel %vm905, %v906, 0.0
      %v908 = vstv %s847
      %v909 = vsel %vm904, %v908, %v907
      %910 = vst [vmem:[#allocation5] sm:$0xff] %v909
    $region21: #{tpu_custom_call.1} parent=1 // pred_fallthru
      _
    // Predicated region
    $region22: #{tpu_custom_call.1} parent=1 // pred_check
      _
    $region23: #{tpu_custom_call.1} parent=1 // pred_check_branch
      %912 = sbr.rel (0) target = $region25
    $region24: #{tpu_custom_call.1} parent=1 // pred_region
      %s914 = ssub.s32 128, 128
      %915 = vsyncadd [#allocation6], %s914
      %s917 = sshll.u32 [#allocation5], 4
      %s918 = int_to_ptr.vmem [resolvable:$true] %s917
      %920 = dma.vmem_to_hbm [thread:$0]  %s918, 128, %s3, [#allocation6]
    $region25: #{tpu_custom_call.1} parent=1 // pred_fallthru
      _
    // Predicated region
    $region26: #{tpu_custom_call.1} parent=1 // pred_check
      _
    $region27: #{tpu_custom_call.1} parent=1 // pred_check_branch
      %922 = sbr.rel (0) target = $region29
    $region28: #{tpu_custom_call.1} parent=1 // pred_region
      %923 = dma.done [#allocation6], 128
    $region29: #{tpu_custom_call.1} parent=1 // pred_fallthru
      _
    %924 = vsyncpa [#allocation6], 1

</llo_original>
